<compile_context>
chip_gen: v7x
topology: tpu7x:2x2x1
jax: 0.10.0
libtpu: 0.0.40
codegen_flags: <defaults>
</compile_context>

<pallas_src>
import jax
import jax.numpy as jnp
from jax.experimental import pallas as pl
from jax.experimental.pallas import tpu as pltpu

# --- problem sizes (synthetic stand-in for `max_movies`) ------------------
MAX_MOVIES = 64     # stands in for max_movies derived from the dataset
H1, H2, H3 = 20, 10, 20
BATCH = 2

SUBLANE = 8         # TPU sublane width (second-to-last dim granularity)


def _round_up(n, m):
    return (n + m - 1) // m * m


def sae_kernel(x_ref,
               w1_ref, b1_ref,
               w2_ref, b2_ref,
               w3_ref, b3_ref,
               w4_ref, b4_ref,
               o_ref):
    """Fused 4-layer MLP forward on one (tile_b, max_movies) batch tile.

    Everything runs in f32 (MXU f32 accumulation, exact sigmoid); the
    workload is HBM-bound so there is no benefit to narrower compute.
    """

    def layer(h, w_ref, b_ref, activate):
        y = jnp.dot(h, w_ref[...], preferred_element_type=jnp.float32)
        y = y + b_ref[...]                      # (1, N) f32 bias broadcast
        if activate:
            # Exact sigmoid: exp on the EUP, exact divide (free slack here).
            y = 1.0 / (1.0 + jnp.exp(-y))
        return y

    h = x_ref[...].astype(jnp.float32)          # (tile_b, M)
    h = layer(h, w1_ref, b1_ref, True)          # (tile_b, H1)
    h = layer(h, w2_ref, b2_ref, True)          # (tile_b, H2)
    h = layer(h, w3_ref, b3_ref, True)          # (tile_b, H3)
    out = layer(h, w4_ref, b4_ref, False)       # (tile_b, M)
    o_ref[...] = out.astype(o_ref.dtype)


def sae_forward(x, params, *, tile_b=1024):
    """x: (B, MAX_MOVIES) float32.  params: (in, out) weights + (1, out) biases.

    Tiles the batch across a 1-D "parallel" grid with lane-exact blocks,
    keeps the tiny weights resident in VMEM, returns (B, MAX_MOVIES) float32.
    """
    B, M = x.shape

    # --- choose the batch tile ---------------------------------------------
    # Small or awkward (non multiple-of-8) batches that fit in one tile use a
    # single full-array block (block dims == array dims is always legal) so
    # no padding and no output slice are needed at all.  Larger batches are
    # split into >= 2 tiles (v7x has 2 TensorCores) of at most `tile_b` rows,
    # with the tile a multiple of the 8-row sublane width; only then may a few
    # tail rows of padding be required.
    if B <= tile_b and B % SUBLANE != 0:
        tile_b = B
        b_pad = B
    else:
        half = _round_up(pl.cdiv(B, 2), SUBLANE)
        tile_b = max(SUBLANE, min(_round_up(tile_b, SUBLANE), half))
        b_pad = _round_up(B, tile_b)

    xp = x if b_pad == B else jnp.pad(x, ((0, b_pad - B), (0, 0)))

    grid = (b_pad // tile_b,)

    def tile_map(i):        # batch tile i
        return (i, 0)

    def resident(i):        # same block every step -> stays in VMEM, no re-DMA
        return (0, 0)

    in_specs = [
        pl.BlockSpec((tile_b, M), tile_map),          # x (lane-exact, f32)
        pl.BlockSpec((M, H1), resident),              # w1
        pl.BlockSpec((1, H1), resident),              # b1
        pl.BlockSpec((H1, H2), resident),             # w2
        pl.BlockSpec((1, H2), resident),              # b2
        pl.BlockSpec((H2, H3), resident),             # w3
        pl.BlockSpec((1, H3), resident),              # b3
        pl.BlockSpec((H3, M), resident),              # w4
        pl.BlockSpec((1, M), resident),               # b4
    ]

    out = pl.pallas_call(
        sae_kernel,
        out_shape=jax.ShapeDtypeStruct((b_pad, M), jnp.float32),
        grid=grid,
        in_specs=in_specs,
        out_specs=pl.BlockSpec((tile_b, M), tile_map),
        compiler_params=pltpu.CompilerParams(
            # Batch tiles are independent -> shard across TensorCores (v7x).
            dimension_semantics=("parallel",),
        ),
    )(xp, params["w1"], params["b1"], params["w2"], params["b2"],
      params["w3"], params["b3"], params["w4"], params["b4"])

    return out if b_pad == B else out[:B]


def init_params(key):
    """Deterministic init mimicking torch.nn.Linear default (uniform +-1/sqrt(fan_in)).

    Weights are stored in (in, out) layout (torch stores (out, in); pre-transposed
    so the kernel computes x @ W + b)."""
    def linear(key, fan_in, fan_out):
        kw, kb = jax.random.split(key)
        bound = 1.0 / jnp.sqrt(jnp.float32(fan_in))
        w = jax.random.uniform(kw, (fan_in, fan_out), jnp.float32, -bound, bound)
        b = jax.random.uniform(kb, (1, fan_out), jnp.float32, -bound, bound)
        return w, b

    k1, k2, k3, k4 = jax.random.split(key, 4)
    w1, b1 = linear(k1, MAX_MOVIES, H1)
    w2, b2 = linear(k2, H1, H2)
    w3, b3 = linear(k3, H2, H3)
    w4, b4 = linear(k4, H3, MAX_MOVIES)
    return {"w1": w1, "b1": b1, "w2": w2, "b2": b2,
            "w3": w3, "b3": b3, "w4": w4, "b4": b4}


def sae_reference(x, p):
    """Pure-JAX f32 reference matching the PyTorch forward."""
    h = jax.nn.sigmoid(x @ p["w1"] + p["b1"])
    h = jax.nn.sigmoid(h @ p["w2"] + p["b2"])
    h = jax.nn.sigmoid(h @ p["w3"] + p["b3"])
    return h @ p["w4"] + p["b4"]


if __name__ == "__main__":
    key = jax.random.PRNGKey(0)
    kx, kp, kx2, kx3 = jax.random.split(key, 4)

    params = init_params(kp)

    # Small demo shape consistent with the module: (batch=2, max_movies=64),
    # synthetic "ratings" in [0, 5].  Single full-array block, no padding.
    x = jax.random.uniform(kx, (BATCH, MAX_MOVIES), jnp.float32, 0.0, 5.0)
    out = jax.block_until_ready(sae_forward(x, params))
    ref = sae_reference(x, params)
    assert out.shape == (BATCH, MAX_MOVIES)
    assert jnp.allclose(out, ref, atol=2e-3, rtol=2e-3), "mismatch vs JAX reference"

    # Larger batch to exercise the multi-tile grid path (2 tiles of 256 rows,
    # no batch padding, no output slice).
    x_big = jax.random.uniform(kx2, (512, MAX_MOVIES), jnp.float32, 0.0, 5.0)
    out_big = jax.block_until_ready(sae_forward(x_big, params))
    ref_big = sae_reference(x_big, params)
    assert jnp.allclose(out_big, ref_big, atol=2e-3, rtol=2e-3), "mismatch (tiled)"

    # Awkward batch (not a multiple of 8) -> single full-array block path.
    x_odd = jax.random.uniform(kx3, (300, MAX_MOVIES), jnp.float32, 0.0, 5.0)
    out_odd = jax.block_until_ready(sae_forward(x_odd, params))
    ref_odd = sae_reference(x_odd, params)
    assert jnp.allclose(out_odd, ref_odd, atol=2e-3, rtol=2e-3), "mismatch (odd batch)"

    # TODO(synk): training loop (MSELoss / RMSprop / sparse-rating masking) is
    # host-side PyTorch machinery, not part of the forward kernel.
    print("KERNEL_OK")
</pallas_src>

<mosaic_0001>
module attributes {stable_mosaic.version = 11 : i64} {
  func.func @sae_kernel(%arg0: i32, %arg1: memref<2x64xf32, #tpu.memory_space<vmem>>, %arg2: memref<64x20xf32, #tpu.memory_space<vmem>>, %arg3: memref<1x20xf32, #tpu.memory_space<vmem>>, %arg4: memref<20x10xf32, #tpu.memory_space<vmem>>, %arg5: memref<1x10xf32, #tpu.memory_space<vmem>>, %arg6: memref<10x20xf32, #tpu.memory_space<vmem>>, %arg7: memref<1x20xf32, #tpu.memory_space<vmem>>, %arg8: memref<20x64xf32, #tpu.memory_space<vmem>>, %arg9: memref<1x64xf32, #tpu.memory_space<vmem>>, %arg10: memref<2x64xf32, #tpu.memory_space<vmem>>) attributes {dimension_semantics = [#tpu.dimension_semantics<parallel>], iteration_bounds = array<i64: 1>, scalar_prefetch = 0 : i64, scratch_operands = 0 : i64, tpu.core_type = #tpu.core_type<tc>, window_params = [{transform_indices = @transform_0, window_bounds = array<i64: 2, 64>}, {pipeline_mode = #tpu.pipeline_mode<synchronous>, transform_indices = @transform_1, window_bounds = array<i64: 64, 20>}, {pipeline_mode = #tpu.pipeline_mode<synchronous>, transform_indices = @transform_2, window_bounds = array<i64: 1, 20>}, {pipeline_mode = #tpu.pipeline_mode<synchronous>, transform_indices = @transform_3, window_bounds = array<i64: 20, 10>}, {pipeline_mode = #tpu.pipeline_mode<synchronous>, transform_indices = @transform_4, window_bounds = array<i64: 1, 10>}, {pipeline_mode = #tpu.pipeline_mode<synchronous>, transform_indices = @transform_5, window_bounds = array<i64: 10, 20>}, {pipeline_mode = #tpu.pipeline_mode<synchronous>, transform_indices = @transform_6, window_bounds = array<i64: 1, 20>}, {pipeline_mode = #tpu.pipeline_mode<synchronous>, transform_indices = @transform_7, window_bounds = array<i64: 20, 64>}, {pipeline_mode = #tpu.pipeline_mode<synchronous>, transform_indices = @transform_8, window_bounds = array<i64: 1, 64>}, {transform_indices = @transform_9, window_bounds = array<i64: 2, 64>}]} {
    %c0 = arith.constant 0 : index
    %c0_0 = arith.constant 0 : index
    %0 = vector.load %arg1[%c0, %c0_0] : memref<2x64xf32, #tpu.memory_space<vmem>>, vector<2x64xf32>
    %c0_1 = arith.constant 0 : index
    %c0_2 = arith.constant 0 : index
    %1 = vector.load %arg2[%c0_1, %c0_2] : memref<64x20xf32, #tpu.memory_space<vmem>>, vector<64x20xf32>
    %cst = arith.constant dense<0.000000e+00> : vector<2x20xf32>
    %2 = tpu.matmul %0, %1, %cst {dimension_numbers = #tpu.dot_dimension_numbers<[1], [0], [0], [1], [0, 0, 1, 1], [], []>} : vector<2x64xf32>, vector<64x20xf32>, vector<2x20xf32> -> vector<2x20xf32>
    %c0_3 = arith.constant 0 : index
    %c0_4 = arith.constant 0 : index
    %3 = vector.load %arg3[%c0_3, %c0_4] : memref<1x20xf32, #tpu.memory_space<vmem>>, vector<1x20xf32>
    %4 = vector.broadcast %3 : vector<1x20xf32> to vector<2x20xf32>
    %5 = arith.addf %2, %4 : vector<2x20xf32>
    %cst_5 = arith.constant 0.000000e+00 : f32
    %6 = vector.broadcast %cst_5 : f32 to vector<2x20xf32>
    %7 = arith.subf %6, %5 : vector<2x20xf32>
    %8 = math.exp %7 : vector<2x20xf32>
    %cst_6 = arith.constant 1.000000e+00 : f32
    %9 = vector.broadcast %cst_6 : f32 to vector<2x20xf32>
    %10 = arith.addf %9, %8 : vector<2x20xf32>
    %cst_7 = arith.constant 1.000000e+00 : f32
    %11 = vector.broadcast %cst_7 : f32 to vector<2x20xf32>
    %12 = arith.divf %11, %10 : vector<2x20xf32>
    %c0_8 = arith.constant 0 : index
    %c0_9 = arith.constant 0 : index
    %13 = vector.load %arg4[%c0_8, %c0_9] : memref<20x10xf32, #tpu.memory_space<vmem>>, vector<20x10xf32>
    %cst_10 = arith.constant dense<0.000000e+00> : vector<2x10xf32>
    %14 = tpu.matmul %12, %13, %cst_10 {dimension_numbers = #tpu.dot_dimension_numbers<[1], [0], [0], [1], [0, 0, 1, 1], [], []>} : vector<2x20xf32>, vector<20x10xf32>, vector<2x10xf32> -> vector<2x10xf32>
    %c0_11 = arith.constant 0 : index
    %c0_12 = arith.constant 0 : index
    %15 = vector.load %arg5[%c0_11, %c0_12] : memref<1x10xf32, #tpu.memory_space<vmem>>, vector<1x10xf32>
    %16 = vector.broadcast %15 : vector<1x10xf32> to vector<2x10xf32>
    %17 = arith.addf %14, %16 : vector<2x10xf32>
    %cst_13 = arith.constant 0.000000e+00 : f32
    %18 = vector.broadcast %cst_13 : f32 to vector<2x10xf32>
    %19 = arith.subf %18, %17 : vector<2x10xf32>
    %20 = math.exp %19 : vector<2x10xf32>
    %cst_14 = arith.constant 1.000000e+00 : f32
    %21 = vector.broadcast %cst_14 : f32 to vector<2x10xf32>
    %22 = arith.addf %21, %20 : vector<2x10xf32>
    %cst_15 = arith.constant 1.000000e+00 : f32
    %23 = vector.broadcast %cst_15 : f32 to vector<2x10xf32>
    %24 = arith.divf %23, %22 : vector<2x10xf32>
    %c0_16 = arith.constant 0 : index
    %c0_17 = arith.constant 0 : index
    %25 = vector.load %arg6[%c0_16, %c0_17] : memref<10x20xf32, #tpu.memory_space<vmem>>, vector<10x20xf32>
    %cst_18 = arith.constant dense<0.000000e+00> : vector<2x20xf32>
    %26 = tpu.matmul %24, %25, %cst_18 {dimension_numbers = #tpu.dot_dimension_numbers<[1], [0], [0], [1], [0, 0, 1, 1], [], []>} : vector<2x10xf32>, vector<10x20xf32>, vector<2x20xf32> -> vector<2x20xf32>
    %c0_19 = arith.constant 0 : index
    %c0_20 = arith.constant 0 : index
    %27 = vector.load %arg7[%c0_19, %c0_20] : memref<1x20xf32, #tpu.memory_space<vmem>>, vector<1x20xf32>
    %28 = vector.broadcast %27 : vector<1x20xf32> to vector<2x20xf32>
    %29 = arith.addf %26, %28 : vector<2x20xf32>
    %cst_21 = arith.constant 0.000000e+00 : f32
    %30 = vector.broadcast %cst_21 : f32 to vector<2x20xf32>
    %31 = arith.subf %30, %29 : vector<2x20xf32>
    %32 = math.exp %31 : vector<2x20xf32>
    %cst_22 = arith.constant 1.000000e+00 : f32
    %33 = vector.broadcast %cst_22 : f32 to vector<2x20xf32>
    %34 = arith.addf %33, %32 : vector<2x20xf32>
    %cst_23 = arith.constant 1.000000e+00 : f32
    %35 = vector.broadcast %cst_23 : f32 to vector<2x20xf32>
    %36 = arith.divf %35, %34 : vector<2x20xf32>
    %c0_24 = arith.constant 0 : index
    %c0_25 = arith.constant 0 : index
    %37 = vector.load %arg8[%c0_24, %c0_25] : memref<20x64xf32, #tpu.memory_space<vmem>>, vector<20x64xf32>
    %cst_26 = arith.constant dense<0.000000e+00> : vector<2x64xf32>
    %38 = tpu.matmul %36, %37, %cst_26 {dimension_numbers = #tpu.dot_dimension_numbers<[1], [0], [0], [1], [0, 0, 1, 1], [], []>} : vector<2x20xf32>, vector<20x64xf32>, vector<2x64xf32> -> vector<2x64xf32>
    %c0_27 = arith.constant 0 : index
    %c0_28 = arith.constant 0 : index
    %39 = vector.load %arg9[%c0_27, %c0_28] : memref<1x64xf32, #tpu.memory_space<vmem>>, vector<1x64xf32>
    %40 = vector.broadcast %39 : vector<1x64xf32> to vector<2x64xf32>
    %41 = arith.addf %38, %40 : vector<2x64xf32>
    %c0_29 = arith.constant 0 : index
    %c0_30 = arith.constant 0 : index
    %42 = vector.load %arg10[%c0_29, %c0_30] : memref<2x64xf32, #tpu.memory_space<vmem>>, vector<2x64xf32>
    tpu.vector_store %arg10[%c0_29, %c0_30], %41 {strides = array<i32>} : memref<2x64xf32, #tpu.memory_space<vmem>>, vector<2x64xf32>,
    return
  }
  func.func @transform_0(%arg0: i32) -> (i32, i32) {
    %c0_i32 = arith.constant 0 : i32
    %c0_i32_0 = arith.constant 0 : i32
    return %arg0, %c0_i32 : i32, i32
  }
  func.func @transform_1(%arg0: i32) -> (i32, i32) {
    %c0_i32 = arith.constant 0 : i32
    %c0_i32_0 = arith.constant 0 : i32
    %c0_i32_1 = arith.constant 0 : i32
    return %c0_i32, %c0_i32_0 : i32, i32
  }
  func.func @transform_2(%arg0: i32) -> (i32, i32) {
    %c0_i32 = arith.constant 0 : i32
    %c0_i32_0 = arith.constant 0 : i32
    %c0_i32_1 = arith.constant 0 : i32
    return %c0_i32, %c0_i32_0 : i32, i32
  }
  func.func @transform_3(%arg0: i32) -> (i32, i32) {
    %c0_i32 = arith.constant 0 : i32
    %c0_i32_0 = arith.constant 0 : i32
    %c0_i32_1 = arith.constant 0 : i32
    return %c0_i32, %c0_i32_0 : i32, i32
  }
  func.func @transform_4(%arg0: i32) -> (i32, i32) {
    %c0_i32 = arith.constant 0 : i32
    %c0_i32_0 = arith.constant 0 : i32
    %c0_i32_1 = arith.constant 0 : i32
    return %c0_i32, %c0_i32_0 : i32, i32
  }
  func.func @transform_5(%arg0: i32) -> (i32, i32) {
    %c0_i32 = arith.constant 0 : i32
    %c0_i32_0 = arith.constant 0 : i32
    %c0_i32_1 = arith.constant 0 : i32
    return %c0_i32, %c0_i32_0 : i32, i32
  }
  func.func @transform_6(%arg0: i32) -> (i32, i32) {
    %c0_i32 = arith.constant 0 : i32
    %c0_i32_0 = arith.constant 0 : i32
    %c0_i32_1 = arith.constant 0 : i32
    return %c0_i32, %c0_i32_0 : i32, i32
  }
  func.func @transform_7(%arg0: i32) -> (i32, i32) {
    %c0_i32 = arith.constant 0 : i32
    %c0_i32_0 = arith.constant 0 : i32
    %c0_i32_1 = arith.constant 0 : i32
    return %c0_i32, %c0_i32_0 : i32, i32
  }
  func.func @transform_8(%arg0: i32) -> (i32, i32) {
    %c0_i32 = arith.constant 0 : i32
    %c0_i32_0 = arith.constant 0 : i32
    %c0_i32_1 = arith.constant 0 : i32
    return %c0_i32, %c0_i32_0 : i32, i32
  }
  func.func @transform_9(%arg0: i32) -> (i32, i32) {
    %c0_i32 = arith.constant 0 : i32
    %c0_i32_0 = arith.constant 0 : i32
    return %arg0, %c0_i32 : i32, i32
  }
}

</mosaic_0001>

<llo_original>
// kernel: tpu_custom_call.1
$region0: #{tpu_custom_call.1}
  #allocation0 [shape = 'u32[]', space=smem, size = 0x4, offset = 0x4, fixed_abs, tag = 'smem constant byte address 0x4 - core index']
  #allocation1 [shape = 'u32[144,128]{1,0:T(1,128)}', space=vmem, size = 0x12000, scoped, tag = 'internal scratch']
  %s0 = inlined_call_operand.vmem [shape: f32[2,64], index: 0, kind: input, shape index: {}]
  %s1 = inlined_call_operand.vmem [shape: f32[64,20], index: 1, kind: input, shape index: {}]
  %s2 = inlined_call_operand.vmem [shape: f32[1,20], index: 2, kind: input, shape index: {}]
  %s3 = inlined_call_operand.vmem [shape: f32[20,10], index: 3, kind: input, shape index: {}]
  %s4 = inlined_call_operand.vmem [shape: f32[1,10], index: 4, kind: input, shape index: {}]
  %s5 = inlined_call_operand.vmem [shape: f32[10,20], index: 5, kind: input, shape index: {}]
  %s6 = inlined_call_operand.vmem [shape: f32[1,20], index: 6, kind: input, shape index: {}]
  %s7 = inlined_call_operand.vmem [shape: f32[20,64], index: 7, kind: input, shape index: {}]
  %s8 = inlined_call_operand.vmem [shape: f32[1,64], index: 8, kind: input, shape index: {}]
  %s9 = inlined_call_operand.hbm [shape: f32[2,64], index: 9, kind: output, shape index: {}]
  %s10 = sld [smem:[#allocation0]]
  $region46: #{tpu_custom_call.1} parent=0
    _
  %s12 = ssub.s32 1, %s10
  %s13 = scalar_select 0, %s12, %s10
  $region1: #{tpu_custom_call.1} parent=0
    #allocation2 [shape = 'u8[1024]{0}', space=vmem, size = 0x400, scoped, tag = 'output window, operand 0, single buffered']
    #allocation3 [shape = 's32[1]{0}', space=sflag, size = 0x4, scoped, tag = 'scoped memory for tpu_custom_call.1']
    %14 = vsyncpa [#allocation3], 0
    // Predicated region
    $region2: #{tpu_custom_call.1} parent=1 // pred_check
      _
    $region3: #{tpu_custom_call.1} parent=1 // pred_check_branch
      %16 = sbr.rel (0) target = $region5
    $region4: #{tpu_custom_call.1} parent=1 // pred_region
      _
    $region5: #{tpu_custom_call.1} parent=1 // pred_fallthru
      _
    // Predicated region
    $region6: #{tpu_custom_call.1} parent=1 // pred_check
      _
    $region7: #{tpu_custom_call.1} parent=1 // pred_check_branch
      %18 = sbr.rel (0) target = $region9
    $region8: #{tpu_custom_call.1} parent=1 // pred_region
      _
    $region9: #{tpu_custom_call.1} parent=1 // pred_fallthru
      _
    // Predicated region
    $region10: #{tpu_custom_call.1} parent=1 // pred_check
      _
    $region11: #{tpu_custom_call.1} parent=1 // pred_check_branch
      %20 = sbr.rel (0) target = $region13
    $region12: #{tpu_custom_call.1} parent=1 // pred_region
      _
    $region13: #{tpu_custom_call.1} parent=1 // pred_fallthru
      _
    // Predicated region
    $region14: #{tpu_custom_call.1} parent=1 // pred_check
      _
    $region15: #{tpu_custom_call.1} parent=1 // pred_check_branch
      %22 = sbr.rel (0) target = $region17
    $region16: #{tpu_custom_call.1} parent=1 // pred_region
      _
    $region17: #{tpu_custom_call.1} parent=1 // pred_fallthru
      _
    // Predicated region
    $region18: #{tpu_custom_call.1} parent=1 // pred_check
      _
    $region19: #{tpu_custom_call.1} parent=1 // pred_check_branch
      %24 = sbr.rel (0) target = $region21
    $region20: #{tpu_custom_call.1} parent=1 // pred_region
      _
    $region21: #{tpu_custom_call.1} parent=1 // pred_fallthru
      _
    // Predicated region
    $region22: #{tpu_custom_call.1} parent=1 // pred_check
      _
    $region23: #{tpu_custom_call.1} parent=1 // pred_check_branch
      %26 = sbr.rel (0) target = $region25
    $region24: #{tpu_custom_call.1} parent=1 // pred_region
      _
    $region25: #{tpu_custom_call.1} parent=1 // pred_fallthru
      _
    // Predicated region
    $region26: #{tpu_custom_call.1} parent=1 // pred_check
      _
    $region27: #{tpu_custom_call.1} parent=1 // pred_check_branch
      %28 = sbr.rel (0) target = $region29
    $region28: #{tpu_custom_call.1} parent=1 // pred_region
      _
    $region29: #{tpu_custom_call.1} parent=1 // pred_fallthru
      _
    // Predicated region
    $region30: #{tpu_custom_call.1} parent=1 // pred_check
      _
    $region31: #{tpu_custom_call.1} parent=1 // pred_check_branch
      %30 = sbr.rel (0) target = $region33
    $region32: #{tpu_custom_call.1} parent=1 // pred_region
      _
    $region33: #{tpu_custom_call.1} parent=1 // pred_fallthru
      _
    // Predicated region
    $region34: #{tpu_custom_call.1} parent=1 // pred_check
      _
    $region35: #{tpu_custom_call.1} parent=1 // pred_check_branch
      %32 = sbr.rel (0) target = $region37
    $region36: #{tpu_custom_call.1} parent=1 // pred_region
      _
    $region37: #{tpu_custom_call.1} parent=1 // pred_fallthru
      _
    %v33 = vld [vmem:[%s0] sm:$0x3]
    %v34 = vld [vmem:[%s1] sm:$0xff]
    %v35 = vld [vmem:[%s1 + $0x8] sm:$0xff]
    %v36 = vld [vmem:[%s1 + $0x10] sm:$0xff]
    %v37 = vld [vmem:[%s1 + $0x18] sm:$0xff]
    %v38 = vld [vmem:[%s1 + $0x20] sm:$0xff]
    %v39 = vld [vmem:[%s1 + $0x28] sm:$0xff]
    %v40 = vld [vmem:[%s1 + $0x30] sm:$0xff]
    %v41 = vld [vmem:[%s1 + $0x38] sm:$0xff]
    %v42 = vld [vmem:[%s2] sm:$0x1]
    %v44 = vlaneseq
    %v45 = vshrl.u32 %v44, 7
    %v46 = vsub.s32 0, %v45
    %v47 = vrot.slane %v42, %v46
    %vm49 = vcmask 523264
    %v51 = vsel %vm49, %v33, 0
    %53 = vmatprep.subr.mxu0 0.0
    %54 = vmatpush1.msra.mxu0 %v34
    %55 = vmatprep.subr.mxu0 0.0
    %56 = vmatpush1.msra.mxu0 %v35
    %57 = vmatprep.subr.mxu0 0.0
    %58 = vmatpush1.msra.mxu0 %v36
    %59 = vmatprep.subr.mxu0 0.0
    %60 = vmatpush1.msra.mxu0 %v37
    %61 = vmatprep.subr.mxu0 0.0
    %62 = vmatpush1.msra.mxu0 %v38
    %63 = vmatprep.subr.mxu0 0.0
    %64 = vmatpush1.msra.mxu0 %v39
    %65 = vmatprep.subr.mxu0 0.0
    %66 = vmatpush1.msra.mxu0 %v40
    %67 = vmatprep.subr.mxu0 0.0
    %68 = vmatpush1.msra.mxu0 %v41
    %69 = vmatprep.subr.mxu0 0.0
    %70 = vmatpush1.msra.mxu0 0.0
    %71 = vmatprep.subr.mxu0 0.0
    %72 = vmatpush1.msra.mxu0 0.0
    %73 = vmatprep.subr.mxu0 0.0
    %74 = vmatpush1.msra.mxu0 0.0
    %75 = vmatprep.subr.mxu0 0.0
    %76 = vmatpush1.msra.mxu0 0.0
    %77 = vmatprep.subr.mxu0 0.0
    %78 = vmatpush1.msra.mxu0 0.0
    %79 = vmatprep.subr.mxu0 0.0
    %80 = vmatpush1.msra.mxu0 0.0
    %81 = vmatprep.subr.mxu0 0.0
    %82 = vmatpush1.msra.mxu0 0.0
    %83 = vmatprep.subr.mxu0 0.0
    %84 = vmatpush1.msra.mxu0 0.0
    %85 = vmatprep.subr.mxu0 0.0
    %86 = vmatpush1.msra.mxu0 0.0
    %87 = vmatprep.subr.mxu0 0.0
    %88 = vmatpush1.msra.mxu0 0.0
    %89 = vmatprep.subr.mxu0 0.0
    %90 = vmatpush1.msra.mxu0 0.0
    %91 = vmatprep.subr.mxu0 0.0
    %92 = vmatpush1.msra.mxu0 0.0
    %93 = vmatprep.subr.mxu0 0.0
    %94 = vmatpush1.msra.mxu0 0.0
    %95 = vmatprep.subr.mxu0 0.0
    %96 = vmatpush1.msra.mxu0 0.0
    %97 = vmatprep.subr.mxu0 0.0
    %98 = vmatpush1.msra.mxu0 0.0
    %99 = vmatprep.subr.mxu0 0.0
    %100 = vmatpush1.msra.mxu0 0.0
    %101 = vmatprep.subr.mxu0 0.0
    %102 = vmatpush1.msra.mxu0 0.0
    %103 = vmatprep.subr.mxu0 0.0
    %104 = vmatpush1.msra.mxu0 0.0
    %105 = vmatprep.subr.mxu0 0.0
    %106 = vmatpush1.msra.mxu0 0.0
    %107 = vmatprep.subr.mxu0 0.0
    %108 = vmatpush1.msra.mxu0 0.0
    %109 = vmatprep.subr.mxu0 0.0
    %110 = vmatpush1.msra.mxu0 0.0
    %111 = vmatprep.subr.mxu0 0.0
    %112 = vmatpush1.msra.mxu0 0.0
    %113 = vmatprep.subr.mxu0 0.0
    %114 = vmatpush1.msra.mxu0 0.0
    %115 = vmatprep.subr.mxu0 0.0
    %116 = vmatpush1.msra.mxu0 0.0
    %117 = vmatprep.mubr.f32.mxu0 0.0
    %118 = vmatmul.mubr.f32.gmra.mrb[0].mxu0 %v51
    %v119 = vpop.f32.mrb[0].mxu0
    %v120 = vadd.f32 %v47, %v119
    %v121 = vpop.f32.mrb[0].mxu0
    %122 = vdwg.mxu0
    %v123 = vsub.f32 0.0, %v120
    %v124 = vmul.f32 %v123, 1.442695
    %v125 = vpow.pop %v124
    %v126 = vadd.f32 %v125, 1.0
    %v127 = vrcp.pop %v126
    %v128 = vmul.f32 1.0, %v127
    %v129 = vld [vmem:[%s3] sm:$0xff]
    %v130 = vld [vmem:[%s3 + $0x8] sm:$0xff]
    %v131 = vld [vmem:[%s3 + $0x10] sm:$0xf]
    %v132 = vld [vmem:[%s4] sm:$0x1]
    %v134 = vlaneseq
    %v135 = vshrl.u32 %v134, 7
    %v136 = vsub.s32 0, %v135
    %v137 = vrot.slane %v132, %v136
    %vm139 = vcmask 162816
    %v141 = vsel %vm139, %v128, 0
    %vm143 = vcmask 1043456
    %v145 = vsel %vm143, %v131, 0
    %147 = vmatprep.subr.mxu0 0.0
    %148 = vmatpush1.msra.mxu0 %v129
    %149 = vmatprep.subr.mxu0 0.0
    %150 = vmatpush1.msra.mxu0 %v130
    %151 = vmatprep.subr.mxu0 0.0
    %152 = vmatpush1.msra.mxu0 %v145
    %153 = vmatprep.subr.mxu0 0.0
    %154 = vmatpush1.msra.mxu0 0.0
    %155 = vmatprep.subr.mxu0 0.0
    %156 = vmatpush1.msra.mxu0 0.0
    %157 = vmatprep.subr.mxu0 0.0
    %158 = vmatpush1.msra.mxu0 0.0
    %159 = vmatprep.subr.mxu0 0.0
    %160 = vmatpush1.msra.mxu0 0.0
    %161 = vmatprep.subr.mxu0 0.0
    %162 = vmatpush1.msra.mxu0 0.0
    %163 = vmatprep.subr.mxu0 0.0
    %164 = vmatpush1.msra.mxu0 0.0
    %165 = vmatprep.subr.mxu0 0.0
    %166 = vmatpush1.msra.mxu0 0.0
    %167 = vmatprep.subr.mxu0 0.0
    %168 = vmatpush1.msra.mxu0 0.0
    %169 = vmatprep.subr.mxu0 0.0
    %170 = vmatpush1.msra.mxu0 0.0
    %171 = vmatprep.subr.mxu0 0.0
    %172 = vmatpush1.msra.mxu0 0.0
    %173 = vmatprep.subr.mxu0 0.0
    %174 = vmatpush1.msra.mxu0 0.0
    %175 = vmatprep.subr.mxu0 0.0
    %176 = vmatpush1.msra.mxu0 0.0
    %177 = vmatprep.subr.mxu0 0.0
    %178 = vmatpush1.msra.mxu0 0.0
    %179 = vmatprep.subr.mxu0 0.0
    %180 = vmatpush1.msra.mxu0 0.0
    %181 = vmatprep.subr.mxu0 0.0
    %182 = vmatpush1.msra.mxu0 0.0
    %183 = vmatprep.subr.mxu0 0.0
    %184 = vmatpush1.msra.mxu0 0.0
    %185 = vmatprep.subr.mxu0 0.0
    %186 = vmatpush1.msra.mxu0 0.0
    %187 = vmatprep.subr.mxu0 0.0
    %188 = vmatpush1.msra.mxu0 0.0
    %189 = vmatprep.subr.mxu0 0.0
    %190 = vmatpush1.msra.mxu0 0.0
    %191 = vmatprep.subr.mxu0 0.0
    %192 = vmatpush1.msra.mxu0 0.0
    %193 = vmatprep.subr.mxu0 0.0
    %194 = vmatpush1.msra.mxu0 0.0
    %195 = vmatprep.subr.mxu0 0.0
    %196 = vmatpush1.msra.mxu0 0.0
    %197 = vmatprep.subr.mxu0 0.0
    %198 = vmatpush1.msra.mxu0 0.0
    %199 = vmatprep.subr.mxu0 0.0
    %200 = vmatpush1.msra.mxu0 0.0
    %201 = vmatprep.subr.mxu0 0.0
    %202 = vmatpush1.msra.mxu0 0.0
    %203 = vmatprep.subr.mxu0 0.0
    %204 = vmatpush1.msra.mxu0 0.0
    %205 = vmatprep.subr.mxu0 0.0
    %206 = vmatpush1.msra.mxu0 0.0
    %207 = vmatprep.subr.mxu0 0.0
    %208 = vmatpush1.msra.mxu0 0.0
    %209 = vmatprep.subr.mxu0 0.0
    %210 = vmatpush1.msra.mxu0 0.0
    %211 = vmatprep.mubr.f32.mxu0 0.0
    %212 = vmatmul.mubr.f32.gmra.mrb[0].mxu0 %v141
    %v213 = vpop.f32.mrb[0].mxu0
    %v214 = vadd.f32 %v137, %v213
    %v215 = vpop.f32.mrb[0].mxu0
    %216 = vdwg.mxu0
    %v217 = vsub.f32 0.0, %v214
    %v218 = vmul.f32 %v217, 1.442695
    %v219 = vpow.pop %v218
    %v220 = vadd.f32 %v219, 1.0
    %v221 = vrcp.pop %v220
    %v222 = vmul.f32 1.0, %v221
    %v223 = vld [vmem:[%s5] sm:$0xff]
    %v224 = vld [vmem:[%s5 + $0x8] sm:$0x3]
    %v225 = vld [vmem:[%s6] sm:$0x1]
    %v227 = vlaneseq
    %v228 = vshrl.u32 %v227, 7
    %v229 = vsub.s32 0, %v228
    %v230 = vrot.slane %v225, %v229
    %vm232 = vcmask 80896
    %v234 = vsel %vm232, %v222, 0
    %vm236 = vcmask 1041408
    %v238 = vsel %vm236, %v224, 0
    %240 = vmatprep.subr.mxu0 0.0
    %241 = vmatpush1.msra.mxu0 %v223
    %242 = vmatprep.subr.mxu0 0.0
    %243 = vmatpush1.msra.mxu0 %v238
    %244 = vmatprep.subr.mxu0 0.0
    %245 = vmatpush1.msra.mxu0 0.0
    %246 = vmatprep.subr.mxu0 0.0
    %247 = vmatpush1.msra.mxu0 0.0
    %248 = vmatprep.subr.mxu0 0.0
    %249 = vmatpush1.msra.mxu0 0.0
    %250 = vmatprep.subr.mxu0 0.0
    %251 = vmatpush1.msra.mxu0 0.0
    %252 = vmatprep.subr.mxu0 0.0
    %253 = vmatpush1.msra.mxu0 0.0
    %254 = vmatprep.subr.mxu0 0.0
    %255 = vmatpush1.msra.mxu0 0.0
    %256 = vmatprep.subr.mxu0 0.0
    %257 = vmatpush1.msra.mxu0 0.0
    %258 = vmatprep.subr.mxu0 0.0
    %259 = vmatpush1.msra.mxu0 0.0
    %260 = vmatprep.subr.mxu0 0.0
    %261 = vmatpush1.msra.mxu0 0.0
    %262 = vmatprep.subr.mxu0 0.0
    %263 = vmatpush1.msra.mxu0 0.0
    %264 = vmatprep.subr.mxu0 0.0
    %265 = vmatpush1.msra.mxu0 0.0
    %266 = vmatprep.subr.mxu0 0.0
    %267 = vmatpush1.msra.mxu0 0.0
    %268 = vmatprep.subr.mxu0 0.0
    %269 = vmatpush1.msra.mxu0 0.0
    %270 = vmatprep.subr.mxu0 0.0
    %271 = vmatpush1.msra.mxu0 0.0
    %272 = vmatprep.subr.mxu0 0.0
    %273 = vmatpush1.msra.mxu0 0.0
    %274 = vmatprep.subr.mxu0 0.0
    %275 = vmatpush1.msra.mxu0 0.0
    %276 = vmatprep.subr.mxu0 0.0
    %277 = vmatpush1.msra.mxu0 0.0
    %278 = vmatprep.subr.mxu0 0.0
    %279 = vmatpush1.msra.mxu0 0.0
    %280 = vmatprep.subr.mxu0 0.0
    %281 = vmatpush1.msra.mxu0 0.0
    %282 = vmatprep.subr.mxu0 0.0
    %283 = vmatpush1.msra.mxu0 0.0
    %284 = vmatprep.subr.mxu0 0.0
    %285 = vmatpush1.msra.mxu0 0.0
    %286 = vmatprep.subr.mxu0 0.0
    %287 = vmatpush1.msra.mxu0 0.0
    %288 = vmatprep.subr.mxu0 0.0
    %289 = vmatpush1.msra.mxu0 0.0
    %290 = vmatprep.subr.mxu0 0.0
    %291 = vmatpush1.msra.mxu0 0.0
    %292 = vmatprep.subr.mxu0 0.0
    %293 = vmatpush1.msra.mxu0 0.0
    %294 = vmatprep.subr.mxu0 0.0
    %295 = vmatpush1.msra.mxu0 0.0
    %296 = vmatprep.subr.mxu0 0.0
    %297 = vmatpush1.msra.mxu0 0.0
    %298 = vmatprep.subr.mxu0 0.0
    %299 = vmatpush1.msra.mxu0 0.0
    %300 = vmatprep.subr.mxu0 0.0
    %301 = vmatpush1.msra.mxu0 0.0
    %302 = vmatprep.subr.mxu0 0.0
    %303 = vmatpush1.msra.mxu0 0.0
    %304 = vmatprep.mubr.f32.mxu0 0.0
    %305 = vmatmul.mubr.f32.gmra.mrb[0].mxu0 %v234
    %v306 = vpop.f32.mrb[0].mxu0
    %v307 = vadd.f32 %v230, %v306
    %v308 = vpop.f32.mrb[0].mxu0
    %309 = vdwg.mxu0
    %v310 = vsub.f32 0.0, %v307
    %v311 = vmul.f32 %v310, 1.442695
    %v312 = vpow.pop %v311
    %v313 = vadd.f32 %v312, 1.0
    %v314 = vrcp.pop %v313
    %v315 = vmul.f32 1.0, %v314
    %v316 = vld [vmem:[%s7] sm:$0xff]
    %v317 = vld [vmem:[%s7 + $0x8] sm:$0xff]
    %v318 = vld [vmem:[%s7 + $0x10] sm:$0xf]
    %v319 = vld [vmem:[%s8] sm:$0x1]
    %v321 = vlaneseq
    %v322 = vshrl.u32 %v321, 7
    %v323 = vsub.s32 0, %v322
    %v324 = vrot.slane %v319, %v323
    %v327 = vsel %vm139, %v315, 0
    %v330 = vsel %vm143, %v318, 0
    %332 = vmatprep.subr.mxu0 0.0
    %333 = vmatpush1.msra.mxu0 %v316
    %334 = vmatprep.subr.mxu0 0.0
    %335 = vmatpush1.msra.mxu0 %v317
    %336 = vmatprep.subr.mxu0 0.0
    %337 = vmatpush1.msra.mxu0 %v330
    %338 = vmatprep.subr.mxu0 0.0
    %339 = vmatpush1.msra.mxu0 0.0
    %340 = vmatprep.subr.mxu0 0.0
    %341 = vmatpush1.msra.mxu0 0.0
    %342 = vmatprep.subr.mxu0 0.0
    %343 = vmatpush1.msra.mxu0 0.0
    %344 = vmatprep.subr.mxu0 0.0
    %345 = vmatpush1.msra.mxu0 0.0
    %346 = vmatprep.subr.mxu0 0.0
    %347 = vmatpush1.msra.mxu0 0.0
    %348 = vmatprep.subr.mxu0 0.0
    %349 = vmatpush1.msra.mxu0 0.0
    %350 = vmatprep.subr.mxu0 0.0
    %351 = vmatpush1.msra.mxu0 0.0
    %352 = vmatprep.subr.mxu0 0.0
    %353 = vmatpush1.msra.mxu0 0.0
    %354 = vmatprep.subr.mxu0 0.0
    %355 = vmatpush1.msra.mxu0 0.0
    %356 = vmatprep.subr.mxu0 0.0
    %357 = vmatpush1.msra.mxu0 0.0
    %358 = vmatprep.subr.mxu0 0.0
    %359 = vmatpush1.msra.mxu0 0.0
    %360 = vmatprep.subr.mxu0 0.0
    %361 = vmatpush1.msra.mxu0 0.0
    %362 = vmatprep.subr.mxu0 0.0
    %363 = vmatpush1.msra.mxu0 0.0
    %364 = vmatprep.subr.mxu0 0.0
    %365 = vmatpush1.msra.mxu0 0.0
    %366 = vmatprep.subr.mxu0 0.0
    %367 = vmatpush1.msra.mxu0 0.0
    %368 = vmatprep.subr.mxu0 0.0
    %369 = vmatpush1.msra.mxu0 0.0
    %370 = vmatprep.subr.mxu0 0.0
    %371 = vmatpush1.msra.mxu0 0.0
    %372 = vmatprep.subr.mxu0 0.0
    %373 = vmatpush1.msra.mxu0 0.0
    %374 = vmatprep.subr.mxu0 0.0
    %375 = vmatpush1.msra.mxu0 0.0
    %376 = vmatprep.subr.mxu0 0.0
    %377 = vmatpush1.msra.mxu0 0.0
    %378 = vmatprep.subr.mxu0 0.0
    %379 = vmatpush1.msra.mxu0 0.0
    %380 = vmatprep.subr.mxu0 0.0
    %381 = vmatpush1.msra.mxu0 0.0
    %382 = vmatprep.subr.mxu0 0.0
    %383 = vmatpush1.msra.mxu0 0.0
    %384 = vmatprep.subr.mxu0 0.0
    %385 = vmatpush1.msra.mxu0 0.0
    %386 = vmatprep.subr.mxu0 0.0
    %387 = vmatpush1.msra.mxu0 0.0
    %388 = vmatprep.subr.mxu0 0.0
    %389 = vmatpush1.msra.mxu0 0.0
    %390 = vmatprep.subr.mxu0 0.0
    %391 = vmatpush1.msra.mxu0 0.0
    %392 = vmatprep.subr.mxu0 0.0
    %393 = vmatpush1.msra.mxu0 0.0
    %394 = vmatprep.subr.mxu0 0.0
    %395 = vmatpush1.msra.mxu0 0.0
    %396 = vmatprep.mubr.f32.mxu0 0.0
    %397 = vmatmul.mubr.f32.gmra.mrb[0].mxu0 %v327
    %v398 = vpop.f32.mrb[0].mxu0
    %v399 = vadd.f32 %v324, %v398
    %v400 = vpop.f32.mrb[0].mxu0
    %401 = vdwg.mxu0
    %vm402 = vcmask 517120
    %403 = vst.msk [vmem:[#allocation2] sm:$0x3] %vm402, %v399
    // Predicated region
    $region38: #{tpu_custom_call.1} parent=1 // pred_check
      _
    $region39: #{tpu_custom_call.1} parent=1 // pred_check_branch
      %405 = sbr.rel (0) target = $region41
    $region40: #{tpu_custom_call.1} parent=1 // pred_region
      %s407 = ssub.s32 32, 32
      %408 = vsyncadd [#allocation3], %s407
      %s410 = sshll.u32 [#allocation2], 4
      %s411 = int_to_ptr.vmem [resolvable:$true] %s410
      %413 = dma.vmem_to_hbm [thread:$0]  %s411, 32, %s9, [#allocation3]
    $region41: #{tpu_custom_call.1} parent=1 // pred_fallthru
      _
    // Predicated region
    $region42: #{tpu_custom_call.1} parent=1 // pred_check
      _
    $region43: #{tpu_custom_call.1} parent=1 // pred_check_branch
      %415 = sbr.rel (0) target = $region45
    $region44: #{tpu_custom_call.1} parent=1 // pred_region
      %416 = dma.done [#allocation3], 32
    $region45: #{tpu_custom_call.1} parent=1 // pred_fallthru
      _
    %417 = vsyncpa [#allocation3], 1

</llo_original>
